<compile_context>
chip_gen: v7x
topology: tpu7x:2x2x1
jax: 0.10.0
libtpu: 0.0.40
codegen_flags: <defaults>
</compile_context>

<pallas_src>
import functools

import jax
import jax.numpy as jnp
from jax.experimental import pallas as pl
from jax.experimental.pallas import tpu as pltpu


def autoencoder_kernel(x_ref,
                       w1_ref, b1_ref,
                       w2r_ref, b2_ref,
                       w3r_ref, b3_ref,
                       w4_ref, b4_ref,
                       o_ref):
    # Cast inside the kernel (free on the VPU; matches PyTorch .float()).
    x = x_ref[...].astype(jnp.float32)                                   # (TB, size)

    # --- to_latent ---
    # Layer 1: size -> 6 (MXU).
    h1 = jnp.dot(x, w1_ref[...], preferred_element_type=jnp.float32) + b1_ref[...]
    h1 = jnp.maximum(h1, 0.0)                                            # (TB, 6)

    # Layer 2: 6 -> 1. K-small / N=1 matmul replaced by VPU multiply + 6-wide reduce.
    z = jnp.sum(h1 * w2r_ref[...], axis=-1, keepdims=True) + b2_ref[...]
    z = jnp.maximum(z, 0.0)                                              # (TB, 1)

    # --- to_origin ---
    # Layer 3: 1 -> 6. Outer product on the VPU (broadcast (TB,1)*(1,6)).
    h2 = jnp.maximum(z * w3r_ref[...] + b3_ref[...], 0.0)                # (TB, 6)

    # Layer 4: 6 -> size (MXU).
    y = jnp.dot(h2, w4_ref[...], preferred_element_type=jnp.float32) + b4_ref[...]
    y = jnp.maximum(y, 0.0)                                              # (TB, size)

    o_ref[...] = y.astype(o_ref.dtype)


def autoencoder_forward(x, params, *, tile_b=128):
    """x: (batch, size) array in any float dtype (cast to f32 in-kernel, like PyTorch .float())."""
    w1, b1, w2_row, b2, w3_row, b3, w4, b4 = params
    batch, size = x.shape
    tile_b = min(tile_b, batch)
    grid = (pl.cdiv(batch, tile_b),)

    # Weights / biases: constant index_map -> loaded once, VMEM-resident across all grid steps.
    resident = lambda arr: pl.BlockSpec(arr.shape, lambda i: (0,) * arr.ndim)

    return pl.pallas_call(
        autoencoder_kernel,
        out_shape=jax.ShapeDtypeStruct((batch, size), jnp.float32),
        grid=grid,
        in_specs=[
            pl.BlockSpec((tile_b, size), lambda i: (i, 0)),   # x tile (pipelined)
            resident(w1), resident(b1),
            resident(w2_row), resident(b2),
            resident(w3_row), resident(b3),
            resident(w4), resident(b4),
        ],
        out_specs=pl.BlockSpec((tile_b, size), lambda i: (i, 0)),
        compiler_params=pltpu.CompilerParams(
            # Batch tiles are independent -> shard across both TCs on v7x.
            dimension_semantics=("parallel",),
        ),
    )(x, w1, b1, w2_row, b2, w3_row, b3, w4, b4)


def init_params(key, size):
    """Deterministic synthetic params matching nn.Linear init (uniform +-1/sqrt(fan_in)).

    Kernel-side layout:
      w1      : (size, 6)   -> x @ w1
      w2_row  : (1, 6)      -> z = sum(h1 * w2_row, -1)   (PyTorch W2 is already (1, 6))
      w3_row  : (1, 6)      -> h2 = z * w3_row            (PyTorch W3 is (6, 1); transposed)
      w4      : (6, size)   -> h2 @ w4
      biases  : (1, out)    -> broadcast add
    """
    def layer(key, fan_in, fan_out):
        kw, kb = jax.random.split(key)
        bound = 1.0 / (fan_in ** 0.5)
        w_pt = jax.random.uniform(kw, (fan_out, fan_in), jnp.float32, -bound, bound)
        b_pt = jax.random.uniform(kb, (fan_out,), jnp.float32, -bound, bound)
        return w_pt, b_pt

    k1, k2, k3, k4 = jax.random.split(key, 4)
    w1_pt, b1_pt = layer(k1, size, 6)   # (6, size)
    w2_pt, b2_pt = layer(k2, 6, 1)      # (1, 6)
    w3_pt, b3_pt = layer(k3, 1, 6)      # (6, 1)
    w4_pt, b4_pt = layer(k4, 6, size)   # (size, 6)

    return (
        w1_pt.T,                 b1_pt.reshape(1, 6),
        w2_pt,                   b2_pt.reshape(1, 1),     # already (1, 6)
        w3_pt.T,                 b3_pt.reshape(1, 6),     # (1, 6)
        w4_pt.T,                 b4_pt.reshape(1, size),
    )


def reference_forward(x, params):
    """Plain-JAX reference with the same math as the PyTorch module."""
    w1, b1, w2_row, b2, w3_row, b3, w4, b4 = params
    h = x.astype(jnp.float32)
    h1 = jnp.maximum(h @ w1 + b1, 0.0)
    z = jnp.maximum(h1 @ w2_row.T + b2, 0.0)
    h2 = jnp.maximum(z @ w3_row + b3, 0.0)
    y = jnp.maximum(h2 @ w4 + b4, 0.0)
    return y


if __name__ == "__main__":
    batch, size = 64, 8
    key = jax.random.PRNGKey(0)
    key, kx = jax.random.split(key)
    x = jax.random.normal(kx, (batch, size), jnp.float32)

    params = init_params(key, size)

    # tile_b=32 -> grid of 2 steps: exercises the batch pipeline even at this small shape.
    fwd = jax.jit(functools.partial(autoencoder_forward, tile_b=32))
    out = jax.block_until_ready(fwd(x, params))

    ref = reference_forward(x, params)
    assert out.shape == (batch, size)
    assert jnp.allclose(out, ref, atol=1e-5, rtol=1e-5), "mismatch vs reference"

    print("KERNEL_OK")
</pallas_src>

<mosaic_0001>
module attributes {stable_mosaic.version = 11 : i64} {
  func.func @autoencoder_kernel(%arg0: i32, %arg1: memref<32x8xf32, #tpu.memory_space<vmem>>, %arg2: memref<8x6xf32, #tpu.memory_space<vmem>>, %arg3: memref<1x6xf32, #tpu.memory_space<vmem>>, %arg4: memref<1x6xf32, #tpu.memory_space<vmem>>, %arg5: memref<1x1xf32, #tpu.memory_space<vmem>>, %arg6: memref<1x6xf32, #tpu.memory_space<vmem>>, %arg7: memref<1x6xf32, #tpu.memory_space<vmem>>, %arg8: memref<6x8xf32, #tpu.memory_space<vmem>>, %arg9: memref<1x8xf32, #tpu.memory_space<vmem>>, %arg10: memref<32x8xf32, #tpu.memory_space<vmem>>) attributes {dimension_semantics = [#tpu.dimension_semantics<parallel>], iteration_bounds = array<i64: 2>, scalar_prefetch = 0 : i64, scratch_operands = 0 : i64, tpu.core_type = #tpu.core_type<tc>, window_params = [{transform_indices = @transform_0, window_bounds = array<i64: 32, 8>}, {pipeline_mode = #tpu.pipeline_mode<synchronous>, transform_indices = @transform_1, window_bounds = array<i64: 8, 6>}, {pipeline_mode = #tpu.pipeline_mode<synchronous>, transform_indices = @transform_2, window_bounds = array<i64: 1, 6>}, {pipeline_mode = #tpu.pipeline_mode<synchronous>, transform_indices = @transform_3, window_bounds = array<i64: 1, 6>}, {pipeline_mode = #tpu.pipeline_mode<synchronous>, transform_indices = @transform_4, window_bounds = array<i64: 1, 1>}, {pipeline_mode = #tpu.pipeline_mode<synchronous>, transform_indices = @transform_5, window_bounds = array<i64: 1, 6>}, {pipeline_mode = #tpu.pipeline_mode<synchronous>, transform_indices = @transform_6, window_bounds = array<i64: 1, 6>}, {pipeline_mode = #tpu.pipeline_mode<synchronous>, transform_indices = @transform_7, window_bounds = array<i64: 6, 8>}, {pipeline_mode = #tpu.pipeline_mode<synchronous>, transform_indices = @transform_8, window_bounds = array<i64: 1, 8>}, {transform_indices = @transform_9, window_bounds = array<i64: 32, 8>}]} {
    %c0 = arith.constant 0 : index
    %c0_0 = arith.constant 0 : index
    %0 = vector.load %arg1[%c0, %c0_0] : memref<32x8xf32, #tpu.memory_space<vmem>>, vector<32x8xf32>
    %c0_1 = arith.constant 0 : index
    %c0_2 = arith.constant 0 : index
    %1 = vector.load %arg2[%c0_1, %c0_2] : memref<8x6xf32, #tpu.memory_space<vmem>>, vector<8x6xf32>
    %cst = arith.constant dense<0.000000e+00> : vector<32x6xf32>
    %2 = tpu.matmul %0, %1, %cst {dimension_numbers = #tpu.dot_dimension_numbers<[1], [0], [0], [1], [0, 0, 1, 1], [], []>} : vector<32x8xf32>, vector<8x6xf32>, vector<32x6xf32> -> vector<32x6xf32>
    %c0_3 = arith.constant 0 : index
    %c0_4 = arith.constant 0 : index
    %3 = vector.load %arg3[%c0_3, %c0_4] : memref<1x6xf32, #tpu.memory_space<vmem>>, vector<1x6xf32>
    %4 = vector.broadcast %3 : vector<1x6xf32> to vector<32x6xf32>
    %5 = arith.addf %2, %4 : vector<32x6xf32>
    %cst_5 = arith.constant 0.000000e+00 : f32
    %6 = vector.broadcast %cst_5 : f32 to vector<32x6xf32>
    %7 = arith.maximumf %5, %6 : vector<32x6xf32>
    %c0_6 = arith.constant 0 : index
    %c0_7 = arith.constant 0 : index
    %8 = vector.load %arg4[%c0_6, %c0_7] : memref<1x6xf32, #tpu.memory_space<vmem>>, vector<1x6xf32>
    %9 = vector.broadcast %8 : vector<1x6xf32> to vector<32x6xf32>
    %10 = arith.mulf %7, %9 : vector<32x6xf32>
    %cst_8 = arith.constant dense<0.000000e+00> : vector<32xf32>
    %11 = vector.multi_reduction <add>, %10, %cst_8 [1] : vector<32x6xf32> to vector<32xf32>
    %12 = vector.shape_cast %11 : vector<32xf32> to vector<32x1xf32>
    %c0_9 = arith.constant 0 : index
    %c0_10 = arith.constant 0 : index
    %13 = vector.load %arg5[%c0_9, %c0_10] : memref<1x1xf32, #tpu.memory_space<vmem>>, vector<1x1xf32>
    %14 = vector.broadcast %13 : vector<1x1xf32> to vector<32x1xf32>
    %15 = arith.addf %12, %14 : vector<32x1xf32>
    %cst_11 = arith.constant 0.000000e+00 : f32
    %16 = vector.broadcast %cst_11 : f32 to vector<32x1xf32>
    %17 = arith.maximumf %15, %16 : vector<32x1xf32>
    %c0_12 = arith.constant 0 : index
    %c0_13 = arith.constant 0 : index
    %18 = vector.load %arg6[%c0_12, %c0_13] : memref<1x6xf32, #tpu.memory_space<vmem>>, vector<1x6xf32>
    %19 = vector.broadcast %17 : vector<32x1xf32> to vector<32x6xf32>
    %20 = vector.broadcast %18 : vector<1x6xf32> to vector<32x6xf32>
    %21 = arith.mulf %19, %20 : vector<32x6xf32>
    %c0_14 = arith.constant 0 : index
    %c0_15 = arith.constant 0 : index
    %22 = vector.load %arg7[%c0_14, %c0_15] : memref<1x6xf32, #tpu.memory_space<vmem>>, vector<1x6xf32>
    %23 = vector.broadcast %22 : vector<1x6xf32> to vector<32x6xf32>
    %24 = arith.addf %21, %23 : vector<32x6xf32>
    %cst_16 = arith.constant 0.000000e+00 : f32
    %25 = vector.broadcast %cst_16 : f32 to vector<32x6xf32>
    %26 = arith.maximumf %24, %25 : vector<32x6xf32>
    %c0_17 = arith.constant 0 : index
    %c0_18 = arith.constant 0 : index
    %27 = vector.load %arg8[%c0_17, %c0_18] : memref<6x8xf32, #tpu.memory_space<vmem>>, vector<6x8xf32>
    %cst_19 = arith.constant dense<0.000000e+00> : vector<32x8xf32>
    %28 = tpu.matmul %26, %27, %cst_19 {dimension_numbers = #tpu.dot_dimension_numbers<[1], [0], [0], [1], [0, 0, 1, 1], [], []>} : vector<32x6xf32>, vector<6x8xf32>, vector<32x8xf32> -> vector<32x8xf32>
    %c0_20 = arith.constant 0 : index
    %c0_21 = arith.constant 0 : index
    %29 = vector.load %arg9[%c0_20, %c0_21] : memref<1x8xf32, #tpu.memory_space<vmem>>, vector<1x8xf32>
    %30 = vector.broadcast %29 : vector<1x8xf32> to vector<32x8xf32>
    %31 = arith.addf %28, %30 : vector<32x8xf32>
    %cst_22 = arith.constant 0.000000e+00 : f32
    %32 = vector.broadcast %cst_22 : f32 to vector<32x8xf32>
    %33 = arith.maximumf %31, %32 : vector<32x8xf32>
    %c0_23 = arith.constant 0 : index
    %c0_24 = arith.constant 0 : index
    %34 = vector.load %arg10[%c0_23, %c0_24] : memref<32x8xf32, #tpu.memory_space<vmem>>, vector<32x8xf32>
    tpu.vector_store %arg10[%c0_23, %c0_24], %33 {strides = array<i32>} : memref<32x8xf32, #tpu.memory_space<vmem>>, vector<32x8xf32>,
    return
  }
  func.func @transform_0(%arg0: i32) -> (i32, i32) {
    %c0_i32 = arith.constant 0 : i32
    %c0_i32_0 = arith.constant 0 : i32
    return %arg0, %c0_i32 : i32, i32
  }
  func.func @transform_1(%arg0: i32) -> (i32, i32) {
    %c0_i32 = arith.constant 0 : i32
    %c0_i32_0 = arith.constant 0 : i32
    %c0_i32_1 = arith.constant 0 : i32
    return %c0_i32, %c0_i32_0 : i32, i32
  }
  func.func @transform_2(%arg0: i32) -> (i32, i32) {
    %c0_i32 = arith.constant 0 : i32
    %c0_i32_0 = arith.constant 0 : i32
    %c0_i32_1 = arith.constant 0 : i32
    return %c0_i32, %c0_i32_0 : i32, i32
  }
  func.func @transform_3(%arg0: i32) -> (i32, i32) {
    %c0_i32 = arith.constant 0 : i32
    %c0_i32_0 = arith.constant 0 : i32
    %c0_i32_1 = arith.constant 0 : i32
    return %c0_i32, %c0_i32_0 : i32, i32
  }
  func.func @transform_4(%arg0: i32) -> (i32, i32) {
    %c0_i32 = arith.constant 0 : i32
    %c0_i32_0 = arith.constant 0 : i32
    %c0_i32_1 = arith.constant 0 : i32
    return %c0_i32, %c0_i32_0 : i32, i32
  }
  func.func @transform_5(%arg0: i32) -> (i32, i32) {
    %c0_i32 = arith.constant 0 : i32
    %c0_i32_0 = arith.constant 0 : i32
    %c0_i32_1 = arith.constant 0 : i32
    return %c0_i32, %c0_i32_0 : i32, i32
  }
  func.func @transform_6(%arg0: i32) -> (i32, i32) {
    %c0_i32 = arith.constant 0 : i32
    %c0_i32_0 = arith.constant 0 : i32
    %c0_i32_1 = arith.constant 0 : i32
    return %c0_i32, %c0_i32_0 : i32, i32
  }
  func.func @transform_7(%arg0: i32) -> (i32, i32) {
    %c0_i32 = arith.constant 0 : i32
    %c0_i32_0 = arith.constant 0 : i32
    %c0_i32_1 = arith.constant 0 : i32
    return %c0_i32, %c0_i32_0 : i32, i32
  }
  func.func @transform_8(%arg0: i32) -> (i32, i32) {
    %c0_i32 = arith.constant 0 : i32
    %c0_i32_0 = arith.constant 0 : i32
    %c0_i32_1 = arith.constant 0 : i32
    return %c0_i32, %c0_i32_0 : i32, i32
  }
  func.func @transform_9(%arg0: i32) -> (i32, i32) {
    %c0_i32 = arith.constant 0 : i32
    %c0_i32_0 = arith.constant 0 : i32
    return %arg0, %c0_i32 : i32, i32
  }
}

</mosaic_0001>

<llo_original>
// kernel: autoencoder_forward.1
$region0: #{autoencoder_forward.1}
  #allocation0 [shape = 'u32[]', space=smem, size = 0x4, offset = 0x4, fixed_abs, tag = 'smem constant byte address 0x4 - core index']
  #allocation1 [shape = 'u32[144,128]{1,0:T(1,128)}', space=vmem, size = 0x12000, scoped, tag = 'internal scratch']
  #allocation2 [shape = 'f32[1,1]{1,0:T(1,128)S(1)}', space=vmem, size = 0x200, scoped, tag = 'scoped memory for autoencoder_forward.1']
  %s0 = inlined_call_operand.vmem [shape: f32[64,8], index: 0, kind: input, shape index: {}]
  %s1 = inlined_call_operand.vmem [shape: f32[8,6], index: 1, kind: input, shape index: {}]
  %s2 = inlined_call_operand.vmem [shape: f32[1,6], index: 2, kind: input, shape index: {}]
  %s3 = inlined_call_operand.vmem [shape: f32[1,6], index: 3, kind: input, shape index: {}]
  %s4 = inlined_call_operand.<no memory space> [shape: f32[1,1], index: 4, kind: input, shape index: {}]
  %s5 = inlined_call_operand.vmem [shape: f32[1,6], index: 5, kind: input, shape index: {}]
  %s6 = inlined_call_operand.vmem [shape: f32[1,6], index: 6, kind: input, shape index: {}]
  %s7 = inlined_call_operand.vmem [shape: f32[6,8], index: 7, kind: input, shape index: {}]
  %s8 = inlined_call_operand.vmem [shape: f32[1,8], index: 8, kind: input, shape index: {}]
  %s9 = inlined_call_operand.vmem [shape: f32[64,8], index: 9, kind: output, shape index: {}]
  %s10 = sld [smem:[#allocation0]]
  $region69: #{autoencoder_forward.1} parent=0
    _
  %s12 = ssub.s32 1, %s10
  %s13 = scalar_select 0, %s12, %s10
  %v14 = vstv %s4
  %15 = vst [vmem:[#allocation2] sm:$0x1] %v14
  loop: start=0, step=1, limit=4
  $region2: #{autoencoder_forward.1} parent=0 // loop_pre_header
    _
  $region3: #{autoencoder_forward.1} parent=0 // loop_header
    %s17 = sphi 0, %s21
    %p18 = scmp.ge.s32.totalorder %s17, 4
    %s27 = sphi 0, %s29
    %s30 = sphi 0, %s27
    %s31 = sphi 0, %s30
    %s47 = sphi 0, %s31
    %s51 = sphi 0, %s51
    %s53 = sphi 0, %s51
    %s54 = sphi 0, %s53
    %s68 = sphi 0, %s54
    %s72 = sphi 0, %s72
    %s74 = sphi 0, %s72
    %s75 = sphi 0, %s74
    %s89 = sphi 0, %s75
    %s93 = sphi 0, %s93
    %s95 = sphi 0, %s93
    %s96 = sphi 0, %s95
    %s110 = sphi 0, %s96
    %s114 = sphi 0, %s114
    %s116 = sphi 0, %s114
    %s117 = sphi 0, %s116
    %s131 = sphi 0, %s117
    %s135 = sphi 0, %s135
    %s137 = sphi 0, %s135
    %s138 = sphi 0, %s137
    %s152 = sphi 0, %s138
    %s156 = sphi 0, %s156
    %s158 = sphi 0, %s156
    %s159 = sphi 0, %s158
    %s173 = sphi 0, %s159
    %s177 = sphi 0, %s177
    %s179 = sphi 0, %s177
    %s180 = sphi 0, %s179
    %s194 = sphi 0, %s180
    %s198 = sphi 0, %s198
    %s200 = sphi 0, %s198
    %s201 = sphi 0, %s200
    %s215 = sphi 0, %s201
    %s221 = sphi 0, %s223
    %s224 = sphi 0, %s221
    %s225 = sphi 0, %s224
    %s241 = sphi 0, %s225
  $region4: #{autoencoder_forward.1} parent=0 // loop_header_branch
    %20 = sbr.rel (%p18) target = $region8
  $region5: #{autoencoder_forward.1} parent=0 // loop_body
    %s22 = ssub.s32 %s17, 1
    %s23 = ssub.s32 %s17, 2
    %s24 = sadd.s32 %s17, 1
    %s25 = ssub.s32 %s17, %s24
    %p26 = scmp.eq.s32.totalorder %s25, 0
    %s28 = sadd.s32 %s27, 1
    %s29 = scalar_select %p26, %s27, %s28
    %p32 = pneg %p26
    %p33 = scmp.eq.s32.totalorder %s17, 1
    %p34 = por %p32, %p33
    %p35 = scmp.ne.s32.totalorder %s27, %s30
    %p36 = scmp.eq.s32.totalorder %s17, 0
    %p37 = por %p35, %p36
    %p38 = scmp.ne.s32.totalorder %s27, %s30
    %p39 = scmp.eq.s32.totalorder %s22, 1
    %p40 = por %p38, %p39
    %p41 = scmp.ne.s32.totalorder %s30, %s31
    %p42 = scmp.eq.s32.totalorder %s22, 0
    %p43 = por %p41, %p42
    %p44 = scmp.ne.s32.totalorder %s30, %s31
    %p45 = scmp.eq.s32.totalorder %s23, 1
    %p46 = por %p44, %p45
    %p48 = scmp.ne.s32.totalorder %s31, %s47
    %p49 = scmp.eq.s32.totalorder %s23, 0
    %p50 = por %p48, %p49
    %s52 = sadd.s32 %s51, 1
    %p55 = scmp.eq.s32.totalorder %s17, 1
    %p56 = scmp.ne.s32.totalorder %s51, %s53
    %p57 = scmp.eq.s32.totalorder %s17, 0
    %p58 = por %p56, %p57
    %p59 = scmp.ne.s32.totalorder %s51, %s53
    %p60 = scmp.eq.s32.totalorder %s22, 1
    %p61 = por %p59, %p60
    %p62 = scmp.ne.s32.totalorder %s53, %s54
    %p63 = scmp.eq.s32.totalorder %s22, 0
    %p64 = por %p62, %p63
    %p65 = scmp.ne.s32.totalorder %s53, %s54
    %p66 = scmp.eq.s32.totalorder %s23, 1
    %p67 = por %p65, %p66
    %p69 = scmp.ne.s32.totalorder %s54, %s68
    %p70 = scmp.eq.s32.totalorder %s23, 0
    %p71 = por %p69, %p70
    %s73 = sadd.s32 %s72, 1
    %p76 = scmp.eq.s32.totalorder %s17, 1
    %p77 = scmp.ne.s32.totalorder %s72, %s74
    %p78 = scmp.eq.s32.totalorder %s17, 0
    %p79 = por %p77, %p78
    %p80 = scmp.ne.s32.totalorder %s72, %s74
    %p81 = scmp.eq.s32.totalorder %s22, 1
    %p82 = por %p80, %p81
    %p83 = scmp.ne.s32.totalorder %s74, %s75
    %p84 = scmp.eq.s32.totalorder %s22, 0
    %p85 = por %p83, %p84
    %p86 = scmp.ne.s32.totalorder %s74, %s75
    %p87 = scmp.eq.s32.totalorder %s23, 1
    %p88 = por %p86, %p87
    %p90 = scmp.ne.s32.totalorder %s75, %s89
    %p91 = scmp.eq.s32.totalorder %s23, 0
    %p92 = por %p90, %p91
    %s94 = sadd.s32 %s93, 1
    %p97 = scmp.eq.s32.totalorder %s17, 1
    %p98 = scmp.ne.s32.totalorder %s93, %s95
    %p99 = scmp.eq.s32.totalorder %s17, 0
    %p100 = por %p98, %p99
    %p101 = scmp.ne.s32.totalorder %s93, %s95
    %p102 = scmp.eq.s32.totalorder %s22, 1
    %p103 = por %p101, %p102
    %p104 = scmp.ne.s32.totalorder %s95, %s96
    %p105 = scmp.eq.s32.totalorder %s22, 0
    %p106 = por %p104, %p105
    %p107 = scmp.ne.s32.totalorder %s95, %s96
    %p108 = scmp.eq.s32.totalorder %s23, 1
    %p109 = por %p107, %p108
    %p111 = scmp.ne.s32.totalorder %s96, %s110
    %p112 = scmp.eq.s32.totalorder %s23, 0
    %p113 = por %p111, %p112
    %s115 = sadd.s32 %s114, 1
    %p118 = scmp.eq.s32.totalorder %s17, 1
    %p119 = scmp.ne.s32.totalorder %s114, %s116
    %p120 = scmp.eq.s32.totalorder %s17, 0
    %p121 = por %p119, %p120
    %p122 = scmp.ne.s32.totalorder %s114, %s116
    %p123 = scmp.eq.s32.totalorder %s22, 1
    %p124 = por %p122, %p123
    %p125 = scmp.ne.s32.totalorder %s116, %s117
    %p126 = scmp.eq.s32.totalorder %s22, 0
    %p127 = por %p125, %p126
    %p128 = scmp.ne.s32.totalorder %s116, %s117
    %p129 = scmp.eq.s32.totalorder %s23, 1
    %p130 = por %p128, %p129
    %p132 = scmp.ne.s32.totalorder %s117, %s131
    %p133 = scmp.eq.s32.totalorder %s23, 0
    %p134 = por %p132, %p133
    %s136 = sadd.s32 %s135, 1
    %p139 = scmp.eq.s32.totalorder %s17, 1
    %p140 = scmp.ne.s32.totalorder %s135, %s137
    %p141 = scmp.eq.s32.totalorder %s17, 0
    %p142 = por %p140, %p141
    %p143 = scmp.ne.s32.totalorder %s135, %s137
    %p144 = scmp.eq.s32.totalorder %s22, 1
    %p145 = por %p143, %p144
    %p146 = scmp.ne.s32.totalorder %s137, %s138
    %p147 = scmp.eq.s32.totalorder %s22, 0
    %p148 = por %p146, %p147
    %p149 = scmp.ne.s32.totalorder %s137, %s138
    %p150 = scmp.eq.s32.totalorder %s23, 1
    %p151 = por %p149, %p150
    %p153 = scmp.ne.s32.totalorder %s138, %s152
    %p154 = scmp.eq.s32.totalorder %s23, 0
    %p155 = por %p153, %p154
    %s157 = sadd.s32 %s156, 1
    %p160 = scmp.eq.s32.totalorder %s17, 1
    %p161 = scmp.ne.s32.totalorder %s156, %s158
    %p162 = scmp.eq.s32.totalorder %s17, 0
    %p163 = por %p161, %p162
    %p164 = scmp.ne.s32.totalorder %s156, %s158
    %p165 = scmp.eq.s32.totalorder %s22, 1
    %p166 = por %p164, %p165
    %p167 = scmp.ne.s32.totalorder %s158, %s159
    %p168 = scmp.eq.s32.totalorder %s22, 0
    %p169 = por %p167, %p168
    %p170 = scmp.ne.s32.totalorder %s158, %s159
    %p171 = scmp.eq.s32.totalorder %s23, 1
    %p172 = por %p170, %p171
    %p174 = scmp.ne.s32.totalorder %s159, %s173
    %p175 = scmp.eq.s32.totalorder %s23, 0
    %p176 = por %p174, %p175
    %s178 = sadd.s32 %s177, 1
    %p181 = scmp.eq.s32.totalorder %s17, 1
    %p182 = scmp.ne.s32.totalorder %s177, %s179
    %p183 = scmp.eq.s32.totalorder %s17, 0
    %p184 = por %p182, %p183
    %p185 = scmp.ne.s32.totalorder %s177, %s179
    %p186 = scmp.eq.s32.totalorder %s22, 1
    %p187 = por %p185, %p186
    %p188 = scmp.ne.s32.totalorder %s179, %s180
    %p189 = scmp.eq.s32.totalorder %s22, 0
    %p190 = por %p188, %p189
    %p191 = scmp.ne.s32.totalorder %s179, %s180
    %p192 = scmp.eq.s32.totalorder %s23, 1
    %p193 = por %p191, %p192
    %p195 = scmp.ne.s32.totalorder %s180, %s194
    %p196 = scmp.eq.s32.totalorder %s23, 0
    %p197 = por %p195, %p196
    %s199 = sadd.s32 %s198, 1
    %p202 = scmp.eq.s32.totalorder %s17, 1
    %p203 = scmp.ne.s32.totalorder %s198, %s200
    %p204 = scmp.eq.s32.totalorder %s17, 0
    %p205 = por %p203, %p204
    %p206 = scmp.ne.s32.totalorder %s198, %s200
    %p207 = scmp.eq.s32.totalorder %s22, 1
    %p208 = por %p206, %p207
    %p209 = scmp.ne.s32.totalorder %s200, %s201
    %p210 = scmp.eq.s32.totalorder %s22, 0
    %p211 = por %p209, %p210
    %p212 = scmp.ne.s32.totalorder %s200, %s201
    %p213 = scmp.eq.s32.totalorder %s23, 1
    %p214 = por %p212, %p213
    %p216 = scmp.ne.s32.totalorder %s201, %s215
    %p217 = scmp.eq.s32.totalorder %s23, 0
    %p218 = por %p216, %p217
    %s219 = ssub.s32 %s17, %s24
    %p220 = scmp.eq.s32.totalorder %s219, 0
    %s222 = sadd.s32 %s221, 1
    %s223 = scalar_select %p220, %s221, %s222
    %p226 = pneg %p220
    %p227 = scmp.eq.s32.totalorder %s17, 1
    %p228 = por %p226, %p227
    %p229 = scmp.ne.s32.totalorder %s221, %s224
    %p230 = scmp.eq.s32.totalorder %s17, 0
    %p231 = por %p229, %p230
    %p232 = scmp.ne.s32.totalorder %s221, %s224
    %p233 = scmp.eq.s32.totalorder %s22, 1
    %p234 = por %p232, %p233
    %p235 = scmp.ne.s32.totalorder %s224, %s225
    %p236 = scmp.eq.s32.totalorder %s22, 0
    %p237 = por %p235, %p236
    %p238 = scmp.ne.s32.totalorder %s224, %s225
    %p239 = scmp.eq.s32.totalorder %s23, 1
    %p240 = por %p238, %p239
    %p242 = scmp.ne.s32.totalorder %s225, %s241
    %p243 = scmp.eq.s32.totalorder %s23, 0
    %p244 = por %p242, %p243
    %p245 = scmp.le.s32.totalorder 1, %s17
    %p246 = scmp.lt.s32.totalorder %s17, 3
    %p247 = pnand %p245, %p246
    %p248 = pneg %p247
    // Predicated region
    $region9: #{autoencoder_forward.1} parent=5 // pred_check
      _
    $region10: #{autoencoder_forward.1} parent=5 // pred_check_branch
      %250 = sbr.rel (%p247) target = $region12
    $region11: #{autoencoder_forward.1} parent=5 // pred_region
      %s251 = ssub.s32 %s17, 1
      // Predicated region
      $region13: #{autoencoder_forward.1} parent=11 // pred_check
        %p252 = pneg %p64
      $region14: #{autoencoder_forward.1} parent=11 // pred_check_branch
        %254 = sbr.rel (%p252) target = $region16
      $region15: #{autoencoder_forward.1} parent=11 // pred_region
        _
      $region16: #{autoencoder_forward.1} parent=11 // pred_fallthru
        _
      // Predicated region
      $region17: #{autoencoder_forward.1} parent=11 // pred_check
        %p255 = pneg %p85
      $region18: #{autoencoder_forward.1} parent=11 // pred_check_branch
        %257 = sbr.rel (%p255) target = $region20
      $region19: #{autoencoder_forward.1} parent=11 // pred_region
        _
      $region20: #{autoencoder_forward.1} parent=11 // pred_fallthru
        _
      // Predicated region
      $region21: #{autoencoder_forward.1} parent=11 // pred_check
        %p258 = pneg %p106
      $region22: #{autoencoder_forward.1} parent=11 // pred_check_branch
        %260 = sbr.rel (%p258) target = $region24
      $region23: #{autoencoder_forward.1} parent=11 // pred_region
        _
      $region24: #{autoencoder_forward.1} parent=11 // pred_fallthru
        _
      // Predicated region
      $region25: #{autoencoder_forward.1} parent=11 // pred_check
        %p261 = pneg %p127
      $region26: #{autoencoder_forward.1} parent=11 // pred_check_branch
        %263 = sbr.rel (%p261) target = $region28
      $region27: #{autoencoder_forward.1} parent=11 // pred_region
        _
      $region28: #{autoencoder_forward.1} parent=11 // pred_fallthru
        _
      // Predicated region
      $region29: #{autoencoder_forward.1} parent=11 // pred_check
        %p264 = pneg %p148
      $region30: #{autoencoder_forward.1} parent=11 // pred_check_branch
        %266 = sbr.rel (%p264) target = $region32
      $region31: #{autoencoder_forward.1} parent=11 // pred_region
        _
      $region32: #{autoencoder_forward.1} parent=11 // pred_fallthru
        _
      // Predicated region
      $region33: #{autoencoder_forward.1} parent=11 // pred_check
        %p267 = pneg %p169
      $region34: #{autoencoder_forward.1} parent=11 // pred_check_branch
        %269 = sbr.rel (%p267) target = $region36
      $region35: #{autoencoder_forward.1} parent=11 // pred_region
        _
      $region36: #{autoencoder_forward.1} parent=11 // pred_fallthru
        _
      // Predicated region
      $region37: #{autoencoder_forward.1} parent=11 // pred_check
        %p270 = pneg %p190
      $region38: #{autoencoder_forward.1} parent=11 // pred_check_branch
        %272 = sbr.rel (%p270) target = $region40
      $region39: #{autoencoder_forward.1} parent=11 // pred_region
        _
      $region40: #{autoencoder_forward.1} parent=11 // pred_fallthru
        _
      // Predicated region
      $region41: #{autoencoder_forward.1} parent=11 // pred_check
        %p273 = pneg %p211
      $region42: #{autoencoder_forward.1} parent=11 // pred_check_branch
        %275 = sbr.rel (%p273) target = $region44
      $region43: #{autoencoder_forward.1} parent=11 // pred_region
        _
      $region44: #{autoencoder_forward.1} parent=11 // pred_fallthru
        _
    $region12: #{autoencoder_forward.1} parent=5 // pred_fallthru
      _
    %p276 = scmp.lt.s32.totalorder %s17, 2
    // Predicated region
    $region45: #{autoencoder_forward.1} parent=5 // pred_check
      %p277 = pneg %p276
    $region46: #{autoencoder_forward.1} parent=5 // pred_check_branch
      %279 = sbr.rel (%p277) target = $region48
    $region47: #{autoencoder_forward.1} parent=5 // pred_region
      // Predicated region
      $region49: #{autoencoder_forward.1} parent=47 // pred_check
        %p280 = pneg %p37
      $region50: #{autoencoder_forward.1} parent=47 // pred_check_branch
        %282 = sbr.rel (%p280) target = $region52
      $region51: #{autoencoder_forward.1} parent=47 // pred_region
        %s283 = smul.u32 4, %s17
        %p284 = scmp.lt.s32.totalorder %s283, 7
        %s285 = scalar_select %p284, %s283, 7
        %s286 = smul.addr %s285, 8
        %s287 = scalar_lea.vmem %s0, %s286
        %s288 = smul.u32 4, %s17
      $region52: #{autoencoder_forward.1} parent=47 // pred_fallthru
        _
    $region48: #{autoencoder_forward.1} parent=5 // pred_fallthru
      _
    %p289 = scmp.le.s32.totalorder 1, %s17
    %p290 = scmp.lt.s32.totalorder %s17, 3
    %p291 = pnand %p289, %p290
    %p292 = pneg %p291
    // Predicated region
    $region53: #{autoencoder_forward.1} parent=5 // pred_check
      _
    $region54: #{autoencoder_forward.1} parent=5 // pred_check_branch
      %294 = sbr.rel (%p291) target = $region56
    $region55: #{autoencoder_forward.1} parent=5 // pred_region
      %s295 = ssub.s32 %s17, 1
      %s296 = smul.u32 4, %s22
      %p297 = scmp.lt.s32.totalorder %s296, 7
      %s298 = scalar_select %p297, %s296, 7
      %s299 = smul.addr %s298, 8
      %s300 = scalar_lea.vmem %s0, %s299
      %p301 = pneg %p43
      %p302 = pneg %p40
      %p303 = pneg %p64
      %p304 = pneg %p61
      %p305 = pneg %p85
      %p306 = pneg %p82
      %p307 = pneg %p106
      %p308 = pneg %p103
      %p309 = pneg %p127
      %p310 = pneg %p124
      %p311 = pneg %p148
      %p312 = pneg %p145
      %p313 = pneg %p169
      %p314 = pneg %p166
      %p315 = pneg %p190
      %p316 = pneg %p187
      %p317 = pneg %p211
      %p318 = pneg %p208
      %p319 = pneg %p237
      %p320 = pneg %p234
      %s321 = smul.u32 4, %s22
      %p322 = scmp.lt.s32.totalorder %s321, 7
      %s323 = scalar_select %p322, %s321, 7
      %s324 = smul.addr %s323, 8
      %s325 = scalar_lea.vmem %s9, %s324
      %s326 = smul.u32 4, %s22
      %p327 = scmp.lt.s32.totalorder %s326, 7
      %s328 = scalar_select %p327, %s326, 7
      %s329 = smul.addr %s328, 8
      %s330 = scalar_lea.vmem %s0, %s329
      %s331 = smul.u32 4, %s22
      %s332 = smul.u32 4, %s22
      %p333 = scmp.lt.s32.totalorder %s332, 7
      %s334 = scalar_select %p333, %s332, 7
      %s335 = smul.addr %s334, 8
      %s336 = scalar_lea.vmem %s9, %s335
      %s337 = smul.u32 4, %s22
      %v338 = vld [vmem:[%s330] sm:$0xff]
      %v339 = vld [vmem:[%s330 + $0x8] sm:$0xff]
      %v340 = vld [vmem:[%s330 + $0x10] sm:$0xff]
      %v341 = vld [vmem:[%s330 + $0x18] sm:$0xff]
      %v342 = vld [vmem:[%s1] sm:$0xff]
      %v343 = vld [vmem:[%s2] sm:$0x1]
      %v345 = vlaneseq
      %v346 = vshrl.u32 %v345, 7
      %v347 = vsub.s32 0, %v346
      %v348 = vrot.slane %v343, %v347
      %vm350 = vcmask 64512
      %v352 = vsel %vm350, %v338, 0
      %v355 = vsel %vm350, %v339, 0
      %v358 = vsel %vm350, %v340, 0
      %v361 = vsel %vm350, %v341, 0
      %363 = vmatprep.subr.mxu0 0.0
      %364 = vmatpush1.msra.mxu0 %v342
      %365 = vmatprep.subr.mxu0 0.0
      %366 = vmatpush1.msra.mxu0 0.0
      %367 = vmatprep.subr.mxu0 0.0
      %368 = vmatpush1.msra.mxu0 0.0
      %369 = vmatprep.subr.mxu0 0.0
      %370 = vmatpush1.msra.mxu0 0.0
      %371 = vmatprep.subr.mxu0 0.0
      %372 = vmatpush1.msra.mxu0 0.0
      %373 = vmatprep.subr.mxu0 0.0
      %374 = vmatpush1.msra.mxu0 0.0
      %375 = vmatprep.subr.mxu0 0.0
      %376 = vmatpush1.msra.mxu0 0.0
      %377 = vmatprep.subr.mxu0 0.0
      %378 = vmatpush1.msra.mxu0 0.0
      %379 = vmatprep.subr.mxu0 0.0
      %380 = vmatpush1.msra.mxu0 0.0
      %381 = vmatprep.subr.mxu0 0.0
      %382 = vmatpush1.msra.mxu0 0.0
      %383 = vmatprep.subr.mxu0 0.0
      %384 = vmatpush1.msra.mxu0 0.0
      %385 = vmatprep.subr.mxu0 0.0
      %386 = vmatpush1.msra.mxu0 0.0
      %387 = vmatprep.subr.mxu0 0.0
      %388 = vmatpush1.msra.mxu0 0.0
      %389 = vmatprep.subr.mxu0 0.0
      %390 = vmatpush1.msra.mxu0 0.0
      %391 = vmatprep.subr.mxu0 0.0
      %392 = vmatpush1.msra.mxu0 0.0
      %393 = vmatprep.subr.mxu0 0.0
      %394 = vmatpush1.msra.mxu0 0.0
      %395 = vmatprep.subr.mxu0 0.0
      %396 = vmatpush1.msra.mxu0 0.0
      %397 = vmatprep.subr.mxu0 0.0
      %398 = vmatpush1.msra.mxu0 0.0
      %399 = vmatprep.subr.mxu0 0.0
      %400 = vmatpush1.msra.mxu0 0.0
      %401 = vmatprep.subr.mxu0 0.0
      %402 = vmatpush1.msra.mxu0 0.0
      %403 = vmatprep.subr.mxu0 0.0
      %404 = vmatpush1.msra.mxu0 0.0
      %405 = vmatprep.subr.mxu0 0.0
      %406 = vmatpush1.msra.mxu0 0.0
      %407 = vmatprep.subr.mxu0 0.0
      %408 = vmatpush1.msra.mxu0 0.0
      %409 = vmatprep.subr.mxu0 0.0
      %410 = vmatpush1.msra.mxu0 0.0
      %411 = vmatprep.subr.mxu0 0.0
      %412 = vmatpush1.msra.mxu0 0.0
      %413 = vmatprep.subr.mxu0 0.0
      %414 = vmatpush1.msra.mxu0 0.0
      %415 = vmatprep.subr.mxu0 0.0
      %416 = vmatpush1.msra.mxu0 0.0
      %417 = vmatprep.subr.mxu0 0.0
      %418 = vmatpush1.msra.mxu0 0.0
      %419 = vmatprep.subr.mxu0 0.0
      %420 = vmatpush1.msra.mxu0 0.0
      %421 = vmatprep.subr.mxu0 0.0
      %422 = vmatpush1.msra.mxu0 0.0
      %423 = vmatprep.subr.mxu0 0.0
      %424 = vmatpush1.msra.mxu0 0.0
      %425 = vmatprep.subr.mxu0 0.0
      %426 = vmatpush1.msra.mxu0 0.0
      %427 = vmatprep.mubr.f32.mxu0 0.0
      %428 = vmatmul.mubr.f32.gmra.mrb[0].mxu0 %v352
      %v429 = vpop.f32.mrb[0].mxu0
      %v430 = vadd.f32 %v348, %v429
      %v431 = vpop.f32.mrb[0].mxu0
      %432 = vmatprep.mubr.f32.mxu0 0.0
      %433 = vmatmul.mubr.f32.gmra.mrb[0].mxu0 %v355
      %v434 = vpop.f32.mrb[0].mxu0
      %v435 = vadd.f32 %v348, %v434
      %v436 = vpop.f32.mrb[0].mxu0
      %437 = vmatprep.mubr.f32.mxu0 0.0
      %438 = vmatmul.mubr.f32.gmra.mrb[0].mxu0 %v358
      %v439 = vpop.f32.mrb[0].mxu0
      %v440 = vadd.f32 %v348, %v439
      %v441 = vpop.f32.mrb[0].mxu0
      %442 = vmatprep.mubr.f32.mxu0 0.0
      %443 = vmatmul.mubr.f32.gmra.mrb[0].mxu0 %v361
      %v444 = vpop.f32.mrb[0].mxu0
      %v445 = vadd.f32 %v348, %v444
      %v446 = vpop.f32.mrb[0].mxu0
      %447 = vdwg.mxu0
      %v448 = vmax.f32 %v430, 0.0
      %v449 = vmax.f32 %v435, 0.0
      %v450 = vmax.f32 %v440, 0.0
      %v451 = vmax.f32 %v445, 0.0
      %v452 = vld [vmem:[%s3] sm:$0x1]
      %v454 = vlaneseq
      %v455 = vshrl.u32 %v454, 7
      %v456 = vsub.s32 0, %v455
      %v457 = vrot.slane %v452, %v456
      %v459 = vmul.f32 %v448, %v457
      %v460 = vmul.f32 %v449, %v457
      %v461 = vmul.f32 %v450, %v457
      %v462 = vmul.f32 %v451, %v457
      %vm463 = vcmask 48128
      %v464 = vsel %vm463, %v459, 0.0
      %465 = vadd.xlane.f32.xlu0 %v464
      %v466 = vpop.xlane.xlu0 %465
      %v467 = vsel %vm463, %v460, 0.0
      %468 = vadd.xlane.f32.xlu0 %v467
      %v469 = vpop.xlane.xlu0 %468
      %v470 = vsel %vm463, %v461, 0.0
      %471 = vadd.xlane.f32.xlu0 %v470
      %v472 = vpop.xlane.xlu0 %471
      %v473 = vsel %vm463, %v462, 0.0
      %474 = vadd.xlane.f32.xlu0 %v473
      %v475 = vpop.xlane.xlu0 %474
      %v476 = vld [vmem:[#allocation2] sm:$0x1]
      %v478 = vlaneseq
      %v479 = vshrl.u32 %v478, 7
      %v480 = vsub.s32 0, %v479
      %v481 = vrot.slane %v476, %v480
      %v483 = vadd.f32 %v466, %v481
      %v484 = vadd.f32 %v469, %v481
      %v485 = vadd.f32 %v472, %v481
      %v486 = vadd.f32 %v475, %v481
      %v487 = vmax.f32 %v483, 0.0
      %v488 = vmax.f32 %v484, 0.0
      %v489 = vmax.f32 %v485, 0.0
      %v490 = vmax.f32 %v486, 0.0
      %v491 = vld [vmem:[%s5] sm:$0x1]
      %493 = vset.pattern.permute.xlu0 0
      %494 = vperm.xlu0 %493, %v487
      %v495 = vpop.permute.xlu0 %494
      %498 = vset.pattern.permute.xlu0 0
      %499 = vperm.xlu0 %498, %v488
      %v500 = vpop.permute.xlu0 %499
      %503 = vset.pattern.permute.xlu0 0
      %504 = vperm.xlu0 %503, %v489
      %v505 = vpop.permute.xlu0 %504
      %508 = vset.pattern.permute.xlu0 0
      %509 = vperm.xlu0 %508, %v490
      %v510 = vpop.permute.xlu0 %509
      %v513 = vlaneseq
      %v514 = vshrl.u32 %v513, 7
      %v515 = vsub.s32 0, %v514
      %v516 = vrot.slane %v491, %v515
      %v518 = vmul.f32 %v495, %v516
      %v519 = vmul.f32 %v500, %v516
      %v520 = vmul.f32 %v505, %v516
      %v521 = vmul.f32 %v510, %v516
      %v522 = vld [vmem:[%s6] sm:$0x1]
      %v524 = vlaneseq
      %v525 = vshrl.u32 %v524, 7
      %v526 = vsub.s32 0, %v525
      %v527 = vrot.slane %v522, %v526
      %v529 = vadd.f32 %v518, %v527
      %v530 = vadd.f32 %v519, %v527
      %v531 = vadd.f32 %v520, %v527
      %v532 = vadd.f32 %v521, %v527
      %v533 = vmax.f32 %v529, 0.0
      %v534 = vmax.f32 %v530, 0.0
      %v535 = vmax.f32 %v531, 0.0
      %v536 = vmax.f32 %v532, 0.0
      %v537 = vld [vmem:[%s7] sm:$0x3f]
      %v538 = vld [vmem:[%s8] sm:$0x1]
      %v540 = vlaneseq
      %v541 = vshrl.u32 %v540, 7
      %v542 = vsub.s32 0, %v541
      %v543 = vrot.slane %v538, %v542
      %v546 = vsel %vm463, %v533, 0
      %v549 = vsel %vm463, %v534, 0
      %v552 = vsel %vm463, %v535, 0
      %v555 = vsel %vm463, %v536, 0
      %vm557 = vcmask 1045504
      %v559 = vsel %vm557, %v537, 0
      %561 = vmatprep.subr.mxu0 0.0
      %562 = vmatpush1.msra.mxu0 %v559
      %563 = vmatprep.subr.mxu0 0.0
      %564 = vmatpush1.msra.mxu0 0.0
      %565 = vmatprep.subr.mxu0 0.0
      %566 = vmatpush1.msra.mxu0 0.0
      %567 = vmatprep.subr.mxu0 0.0
      %568 = vmatpush1.msra.mxu0 0.0
      %569 = vmatprep.subr.mxu0 0.0
      %570 = vmatpush1.msra.mxu0 0.0
      %571 = vmatprep.subr.mxu0 0.0
      %572 = vmatpush1.msra.mxu0 0.0
      %573 = vmatprep.subr.mxu0 0.0
      %574 = vmatpush1.msra.mxu0 0.0
      %575 = vmatprep.subr.mxu0 0.0
      %576 = vmatpush1.msra.mxu0 0.0
      %577 = vmatprep.subr.mxu0 0.0
      %578 = vmatpush1.msra.mxu0 0.0
      %579 = vmatprep.subr.mxu0 0.0
      %580 = vmatpush1.msra.mxu0 0.0
      %581 = vmatprep.subr.mxu0 0.0
      %582 = vmatpush1.msra.mxu0 0.0
      %583 = vmatprep.subr.mxu0 0.0
      %584 = vmatpush1.msra.mxu0 0.0
      %585 = vmatprep.subr.mxu0 0.0
      %586 = vmatpush1.msra.mxu0 0.0
      %587 = vmatprep.subr.mxu0 0.0
      %588 = vmatpush1.msra.mxu0 0.0
      %589 = vmatprep.subr.mxu0 0.0
      %590 = vmatpush1.msra.mxu0 0.0
      %591 = vmatprep.subr.mxu0 0.0
      %592 = vmatpush1.msra.mxu0 0.0
      %593 = vmatprep.subr.mxu0 0.0
      %594 = vmatpush1.msra.mxu0 0.0
      %595 = vmatprep.subr.mxu0 0.0
      %596 = vmatpush1.msra.mxu0 0.0
      %597 = vmatprep.subr.mxu0 0.0
      %598 = vmatpush1.msra.mxu0 0.0
      %599 = vmatprep.subr.mxu0 0.0
      %600 = vmatpush1.msra.mxu0 0.0
      %601 = vmatprep.subr.mxu0 0.0
      %602 = vmatpush1.msra.mxu0 0.0
      %603 = vmatprep.subr.mxu0 0.0
      %604 = vmatpush1.msra.mxu0 0.0
      %605 = vmatprep.subr.mxu0 0.0
      %606 = vmatpush1.msra.mxu0 0.0
      %607 = vmatprep.subr.mxu0 0.0
      %608 = vmatpush1.msra.mxu0 0.0
      %609 = vmatprep.subr.mxu0 0.0
      %610 = vmatpush1.msra.mxu0 0.0
      %611 = vmatprep.subr.mxu0 0.0
      %612 = vmatpush1.msra.mxu0 0.0
      %613 = vmatprep.subr.mxu0 0.0
      %614 = vmatpush1.msra.mxu0 0.0
      %615 = vmatprep.subr.mxu0 0.0
      %616 = vmatpush1.msra.mxu0 0.0
      %617 = vmatprep.subr.mxu0 0.0
      %618 = vmatpush1.msra.mxu0 0.0
      %619 = vmatprep.subr.mxu0 0.0
      %620 = vmatpush1.msra.mxu0 0.0
      %621 = vmatprep.subr.mxu0 0.0
      %622 = vmatpush1.msra.mxu0 0.0
      %623 = vmatprep.subr.mxu0 0.0
      %624 = vmatpush1.msra.mxu0 0.0
      %625 = vmatprep.mubr.f32.mxu0 0.0
      %626 = vmatmul.mubr.f32.gmra.mrb[0].mxu0 %v546
      %v627 = vpop.f32.mrb[0].mxu0
      %v628 = vadd.f32 %v543, %v627
      %v629 = vpop.f32.mrb[0].mxu0
      %630 = vmatprep.mubr.f32.mxu0 0.0
      %631 = vmatmul.mubr.f32.gmra.mrb[0].mxu0 %v549
      %v632 = vpop.f32.mrb[0].mxu0
      %v633 = vadd.f32 %v543, %v632
      %v634 = vpop.f32.mrb[0].mxu0
      %635 = vmatprep.mubr.f32.mxu0 0.0
      %636 = vmatmul.mubr.f32.gmra.mrb[0].mxu0 %v552
      %v637 = vpop.f32.mrb[0].mxu0
      %v638 = vadd.f32 %v543, %v637
      %v639 = vpop.f32.mrb[0].mxu0
      %640 = vmatprep.mubr.f32.mxu0 0.0
      %641 = vmatmul.mubr.f32.gmra.mrb[0].mxu0 %v555
      %v642 = vpop.f32.mrb[0].mxu0
      %v643 = vadd.f32 %v543, %v642
      %v644 = vpop.f32.mrb[0].mxu0
      %645 = vdwg.mxu0
      %v646 = vmax.f32 %v628, 0.0
      %v647 = vmax.f32 %v633, 0.0
      %v648 = vmax.f32 %v638, 0.0
      %v649 = vmax.f32 %v643, 0.0
      %650 = vst.msk [vmem:[%s336] sm:$0xff] %vm350, %v646
      %651 = vst.msk [vmem:[%s336 + $0x8] sm:$0xff] %vm350, %v647
      %652 = vst.msk [vmem:[%s336 + $0x10] sm:$0xff] %vm350, %v648
      %653 = vst.msk [vmem:[%s336 + $0x18] sm:$0xff] %vm350, %v649
      %s654 = smul.u32 4, %s22
      %p655 = scmp.lt.s32.totalorder %s654, 7
      %s656 = scalar_select %p655, %s654, 7
      %s657 = smul.addr %s656, 8
      %s658 = scalar_lea.vmem %s9, %s657
      // Predicated region
      $region57: #{autoencoder_forward.1} parent=55 // pred_check
        %p659 = pneg %p234
      $region58: #{autoencoder_forward.1} parent=55 // pred_check_branch
        %661 = sbr.rel (%p659) target = $region60
      $region59: #{autoencoder_forward.1} parent=55 // pred_region
        %s662 = smul.u32 4, %s22
      $region60: #{autoencoder_forward.1} parent=55 // pred_fallthru
        _
    $region56: #{autoencoder_forward.1} parent=5 // pred_fallthru
      _
    %p663 = scmp.le.s32.totalorder 2, %s17
    // Predicated region
    $region61: #{autoencoder_forward.1} parent=5 // pred_check
      %p664 = pneg %p663
    $region62: #{autoencoder_forward.1} parent=5 // pred_check_branch
      %666 = sbr.rel (%p664) target = $region64
    $region63: #{autoencoder_forward.1} parent=5 // pred_region
      %s667 = ssub.s32 %s17, 2
      // Predicated region
      $region65: #{autoencoder_forward.1} parent=63 // pred_check
        %p668 = pneg %p240
      $region66: #{autoencoder_forward.1} parent=63 // pred_check_branch
        %670 = sbr.rel (%p668) target = $region68
      $region67: #{autoencoder_forward.1} parent=63 // pred_region
        %s671 = smul.u32 4, %s23
        %p672 = scmp.lt.s32.totalorder %s671, 7
        %s673 = scalar_select %p672, %s671, 7
        %s674 = smul.addr %s673, 8
        %s675 = scalar_lea.vmem %s9, %s674
      $region68: #{autoencoder_forward.1} parent=63 // pred_fallthru
        _
    $region64: #{autoencoder_forward.1} parent=5 // pred_fallthru
      _
  $region6: #{autoencoder_forward.1} parent=0 // loop_footer
    %s21 = sadd.s32 1, %s17
  $region7: #{autoencoder_forward.1} parent=0 // loop_footer_branch
    %16 = sbr.rel target = $region3
  $region8: #{autoencoder_forward.1} parent=0 // loop_exit
    _

</llo_original>
